<compile_context>
chip_gen: v6e
topology: v6e:2x2x1
jax: 0.10.0
libtpu: 0.0.40
codegen_flags: <defaults>
</compile_context>

<pallas_src>
import functools

import jax
import jax.numpy as jnp
from jax.experimental import pallas as pl
from jax.experimental.pallas import tpu as pltpu


def _round_up(x: int, m: int) -> int:
    return ((x + m - 1) // m) * m


def _cdiv(a: int, b: int) -> int:
    return (a + b - 1) // b


def _linear_kernel(x_ref, w_ref, b_ref, o_ref, acc_ref):
    """One (tb, tc) output tile; accumulates over the K (feature) grid axis.

    x_ref:   (tb, tk)  activations (mxu dtype)
    w_ref:   (tk, tc)  pre-transposed weight tile (mxu dtype)
    b_ref:   (1,  tc)  bias (f32)
    o_ref:   (tb, tc)  output tile
    acc_ref: (tb, tc)  f32 accumulator (VMEM scratch, resident across K)
    """
    k = pl.program_id(2)

    @pl.when(k == 0)
    def _():
        acc_ref[...] = jnp.zeros_like(acc_ref)

    # Standard (M,K)x(K,N) MXU contraction, f32 accumulation.
    acc_ref[...] += jnp.dot(x_ref[...], w_ref[...],
                            preferred_element_type=jnp.float32)

    @pl.when(k == pl.num_programs(2) - 1)
    def _():
        # Bias add + cast once, on the final K step.
        o_ref[...] = (acc_ref[...] + b_ref[...]).astype(o_ref.dtype)


@functools.partial(jax.jit,
                   static_argnames=("num_classes", "tc", "tk", "tb_max"))
def _linear_forward(x, w_t, b_row, *, num_classes, tc, tk, tb_max):
    """y = x @ W.T + b with pre-padded / pre-transposed params.

    x:     [B, F]        (any float dtype; output keeps x.dtype)
    w_t:   [Fp, Cp]      padded, transposed, pre-cast weight
    b_row: [1, Cp]       padded f32 bias
    """
    B, F = x.shape
    Fp, Cp = w_t.shape
    mm_dtype = w_t.dtype
    out_dtype = x.dtype
    mm_bytes = jnp.dtype(mm_dtype).itemsize
    out_bytes = jnp.dtype(out_dtype).itemsize
    sub = 16 if mm_bytes < 4 else 8          # bf16 sublane packing is 16 rows

    # ---- batch tiling: one full-batch tile when it fits (weights streamed
    # exactly once); otherwise balanced sublane-aligned tiles.  If the class
    # axis has a single tile, split the batch so v7x's 2nd TC gets work. ----
    Bp0 = _round_up(B, sub)
    n_tb = _cdiv(Bp0, tb_max)
    if (Cp // tc) == 1 and Bp0 >= 2 * sub:
        n_tb = max(n_tb, 2)
    tb = _round_up(_cdiv(Bp0, n_tb), sub)
    Bp = _round_up(Bp0, tb)

    # Per-call x prep only: pad (zeros are matmul-neutral in padded K) + cast.
    xp = jnp.pad(x, ((0, Bp - B), (0, Fp - F))).astype(mm_dtype)

    grid = (Bp // tb, Cp // tc, Fp // tk)

    # Double-buffered VMEM footprint + headroom; set the scoped limit
    # explicitly (v5e default is only 16 MiB, v7x physical VMEM is 64 MiB).
    vmem_bytes = (2 * (tb * tk + tk * tc) * mm_bytes     # x + weight tiles
                  + 2 * tb * tc * out_bytes              # output tiles
                  + tb * tc * 4                          # accumulator
                  + 2 * tc * 4                           # bias
                  + (4 << 20))
    vmem_bytes = int(min(max(vmem_bytes, 16 << 20), 64 << 20))

    out_padded = pl.pallas_call(
        _linear_kernel,
        out_shape=jax.ShapeDtypeStruct((Bp, Cp), out_dtype),
        grid=grid,
        in_specs=[
            pl.BlockSpec((tb, tk), lambda i, j, k: (i, k)),   # x
            pl.BlockSpec((tk, tc), lambda i, j, k: (k, j)),   # W.T (pre-transposed)
            pl.BlockSpec((1, tc),  lambda i, j, k: (0, j)),   # bias
        ],
        out_specs=pl.BlockSpec((tb, tc), lambda i, j, k: (i, j)),
        scratch_shapes=[pltpu.VMEM((tb, tc), jnp.float32)],
        compiler_params=pltpu.CompilerParams(
            dimension_semantics=("parallel", "parallel", "arbitrary"),
            vmem_limit_bytes=vmem_bytes),
        cost_estimate=pl.CostEstimate(
            flops=2 * B * num_classes * F,
            transcendentals=0,
            bytes_accessed=(B * F + num_classes * F) * mm_bytes
                           + B * num_classes * out_bytes),
    )(xp, w_t, b_row)

    # Slice padded rows / class lanes back to the true output shape.
    return out_padded[:B, :num_classes]


class PallasLinearClassifier:
    """Pallas-backed equivalent of LinearClassifier (nn.Linear forward).

    All weight-side padding / transpose / dtype cast happens ONCE here at
    construction time (it is a constant), so the per-call path never touches
    the weight in HBM beyond the single streamed read inside the kernel.
    """

    def __init__(self, weight, bias, *, mxu_dtype=jnp.bfloat16,
                 tc_max=512, tk_max=2048, tb_max=1024):
        C, F = weight.shape
        assert bias.shape == (C,)
        self.num_classes = C
        self.tb_max = tb_max

        # Class (output) tiling: lane-dense (x128), balanced, and >=2 tiles
        # whenever C allows so both v7x TensorCores stream disjoint weights.
        Cp0 = _round_up(C, 128)
        n_tc = _cdiv(Cp0, tc_max)
        if n_tc == 1 and Cp0 >= 256:
            n_tc = 2
        self.tc = _round_up(_cdiv(Cp0, n_tc), 128)
        Cp = _round_up(Cp0, self.tc)

        # Feature (contraction) tiling: balanced 128-aligned tiles (minimal
        # K padding); single full-F step when F fits one tile.
        if F <= tk_max:
            self.tk, Fp = F, F
        else:
            n_tk = _cdiv(F, tk_max)
            self.tk = _round_up(_cdiv(F, n_tk), 128)
            Fp = _round_up(F, self.tk)

        # One-time weight prep: zero-pad, transpose to [Fp, Cp], cast.
        wp = jnp.pad(jnp.asarray(weight), ((0, Cp - C), (0, Fp - F)))
        self.w_t = jnp.asarray(wp.T, dtype=mxu_dtype)
        self.b_row = (jnp.pad(jnp.asarray(bias), (0, Cp - C))
                      .astype(jnp.float32).reshape(1, Cp))

    def __call__(self, x):
        return _linear_forward(x, self.w_t, self.b_row,
                               num_classes=self.num_classes,
                               tc=self.tc, tk=self.tk, tb_max=self.tb_max)


if __name__ == "__main__":
    # Small shapes consistent with the module: feature_size=32, num_classes=16.
    batch, feature_size, num_classes = 8, 32, 16

    key = jax.random.PRNGKey(0)
    kx, kw, kb = jax.random.split(key, 3)

    # Deterministic parameter init (uniform, like nn.Linear's default range).
    bound = 1.0 / (feature_size ** 0.5)
    weight = jax.random.uniform(
        kw, (num_classes, feature_size), jnp.float32, -bound, bound)
    bias = jax.random.uniform(
        kb, (num_classes,), jnp.float32, -bound, bound)

    x = jax.random.normal(kx, (batch, feature_size), jnp.float32)
    ref = x @ weight.T + bias

    # Default path: bf16 MXU operands, f32 accumulate (looser tolerance).
    model_bf16 = PallasLinearClassifier(weight, bias)          # mxu_dtype=bf16
    out_bf16 = jax.block_until_ready(model_bf16(x))
    assert out_bf16.shape == (batch, num_classes)
    assert out_bf16.dtype == x.dtype
    assert jnp.allclose(out_bf16, ref, atol=2e-2, rtol=2e-2)

    # Full-f32 path for a tight numerical check of the kernel itself.
    model_f32 = PallasLinearClassifier(weight, bias, mxu_dtype=jnp.float32)
    out_f32 = jax.block_until_ready(model_f32(x))
    assert jnp.allclose(out_f32, ref, atol=1e-5, rtol=1e-5)

    print("KERNEL_OK")
</pallas_src>

<mosaic_0001>
module attributes {stable_mosaic.version = 11 : i64} {
  func.func @_linear_kernel(%arg0: i32, %arg1: i32, %arg2: i32, %arg3: memref<16x32xbf16, #tpu.memory_space<vmem>>, %arg4: memref<32x128xbf16, #tpu.memory_space<vmem>>, %arg5: memref<1x128xf32, #tpu.memory_space<vmem>>, %arg6: memref<16x128xf32, #tpu.memory_space<vmem>>, %arg7: memref<16x128xf32, #tpu.memory_space<vmem>>) attributes {dimension_semantics = [#tpu.dimension_semantics<parallel>, #tpu.dimension_semantics<parallel>, #tpu.dimension_semantics<arbitrary>], iteration_bounds = array<i64: 1, 1, 1>, scalar_prefetch = 0 : i64, scratch_operands = 1 : i64, tpu.core_type = #tpu.core_type<tc>, window_params = [{transform_indices = @transform_0, window_bounds = array<i64: 16, 32>}, {transform_indices = @transform_1, window_bounds = array<i64: 32, 128>}, {transform_indices = @transform_2, window_bounds = array<i64: 1, 128>}, {transform_indices = @transform_3, window_bounds = array<i64: 16, 128>}]} {
    %c0_i32 = arith.constant 0 : i32
    %0 = arith.cmpi eq, %arg2, %c0_i32 : i32
    %1 = arith.extui %0 : i1 to i32
    %c0_i32_0 = arith.constant 0 : i32
    %2 = arith.cmpi ne, %1, %c0_i32_0 : i32
    scf.if %2 {
      %cst_10 = arith.constant 0.000000e+00 : f32
      %12 = vector.broadcast %cst_10 : f32 to vector<16x128xf32>
      %c0_11 = arith.constant 0 : index
      %c0_12 = arith.constant 0 : index
      %13 = vector.load %arg7[%c0_11, %c0_12] : memref<16x128xf32, #tpu.memory_space<vmem>>, vector<16x128xf32>
      tpu.vector_store %arg7[%c0_11, %c0_12], %12 {strides = array<i32>} : memref<16x128xf32, #tpu.memory_space<vmem>>, vector<16x128xf32>,
    } else {
    }
    %c0 = arith.constant 0 : index
    %c0_1 = arith.constant 0 : index
    %3 = vector.load %arg7[%c0, %c0_1] : memref<16x128xf32, #tpu.memory_space<vmem>>, vector<16x128xf32>
    %c0_2 = arith.constant 0 : index
    %c0_3 = arith.constant 0 : index
    %4 = vector.load %arg3[%c0_2, %c0_3] : memref<16x32xbf16, #tpu.memory_space<vmem>>, vector<16x32xbf16>
    %c0_4 = arith.constant 0 : index
    %c0_5 = arith.constant 0 : index
    %5 = vector.load %arg4[%c0_4, %c0_5] : memref<32x128xbf16, #tpu.memory_space<vmem>>, vector<32x128xbf16>
    %cst = arith.constant dense<0.000000e+00> : vector<16x128xf32>
    %6 = tpu.matmul %4, %5, %cst {dimension_numbers = #tpu.dot_dimension_numbers<[1], [0], [0], [1], [0, 0, 1, 1], [], []>} : vector<16x32xbf16>, vector<32x128xbf16>, vector<16x128xf32> -> vector<16x128xf32>
    %7 = arith.addf %3, %6 : vector<16x128xf32>
    %c0_6 = arith.constant 0 : index
    %c0_7 = arith.constant 0 : index
    %8 = vector.load %arg7[%c0_6, %c0_7] : memref<16x128xf32, #tpu.memory_space<vmem>>, vector<16x128xf32>
    tpu.vector_store %arg7[%c0_6, %c0_7], %7 {strides = array<i32>} : memref<16x128xf32, #tpu.memory_space<vmem>>, vector<16x128xf32>,
    %c0_i32_8 = arith.constant 0 : i32
    %9 = arith.cmpi eq, %arg2, %c0_i32_8 : i32
    %10 = arith.extui %9 : i1 to i32
    %c0_i32_9 = arith.constant 0 : i32
    %11 = arith.cmpi ne, %10, %c0_i32_9 : i32
    scf.if %11 {
      %c0_10 = arith.constant 0 : index
      %c0_11 = arith.constant 0 : index
      %12 = vector.load %arg7[%c0_10, %c0_11] : memref<16x128xf32, #tpu.memory_space<vmem>>, vector<16x128xf32>
      %c0_12 = arith.constant 0 : index
      %c0_13 = arith.constant 0 : index
      %13 = vector.load %arg5[%c0_12, %c0_13] : memref<1x128xf32, #tpu.memory_space<vmem>>, vector<1x128xf32>
      %14 = vector.broadcast %13 : vector<1x128xf32> to vector<16x128xf32>
      %15 = arith.addf %12, %14 : vector<16x128xf32>
      %c0_14 = arith.constant 0 : index
      %c0_15 = arith.constant 0 : index
      %16 = vector.load %arg6[%c0_14, %c0_15] : memref<16x128xf32, #tpu.memory_space<vmem>>, vector<16x128xf32>
      tpu.vector_store %arg6[%c0_14, %c0_15], %15 {strides = array<i32>} : memref<16x128xf32, #tpu.memory_space<vmem>>, vector<16x128xf32>,
    } else {
    }
    return
  }
  func.func @transform_0(%arg0: i32, %arg1: i32, %arg2: i32) -> (i32, i32) {
    %c0_i32 = arith.constant 0 : i32
    return %arg0, %arg2 : i32, i32
  }
  func.func @transform_1(%arg0: i32, %arg1: i32, %arg2: i32) -> (i32, i32) {
    %c0_i32 = arith.constant 0 : i32
    return %arg2, %arg1 : i32, i32
  }
  func.func @transform_2(%arg0: i32, %arg1: i32, %arg2: i32) -> (i32, i32) {
    %c0_i32 = arith.constant 0 : i32
    %c0_i32_0 = arith.constant 0 : i32
    return %c0_i32, %arg1 : i32, i32
  }
  func.func @transform_3(%arg0: i32, %arg1: i32, %arg2: i32) -> (i32, i32) {
    %c0_i32 = arith.constant 0 : i32
    return %arg0, %arg1 : i32, i32
  }
}

</mosaic_0001>

<llo_original>
// kernel: _linear_forward.1
$region0: #{_linear_forward.1}
  #allocation0 [shape = 'u32[]', space=smem, size = 0x4, offset = 0x4, fixed_abs, tag = 'smem constant byte address 0x4 - core index']
  #allocation1 [shape = 'u32[144,128]{1,0:T(1,128)}', space=vmem, size = 0x12000, scoped, tag = 'internal scratch']
  #allocation2 [shape = 'f32[16,128]{1,0:T(8,128)}', space=vmem, size = 0x2000, scoped, tag = 'scratch operand']
  %s0 = inlined_call_operand.vmem [shape: bf16[16,32], index: 0, kind: input, shape index: {}]
  %s1 = inlined_call_operand.vmem [shape: bf16[32,128], index: 1, kind: input, shape index: {}]
  %s2 = inlined_call_operand.vmem [shape: f32[1,128], index: 2, kind: input, shape index: {}]
  %s3 = inlined_call_operand.vmem [shape: f32[16,128], index: 3, kind: output, shape index: {}]
  %s4 = sld [smem:[#allocation0]]
  $region30: #{_linear_forward.1} parent=0
    _
  %s6 = ssub.s32 1, %s4
  %s7 = scalar_select 0, %s6, %s4
  // Predicated region
  $region2: #{_linear_forward.1} parent=0 // pred_check
    _
  $region3: #{_linear_forward.1} parent=0 // pred_check_branch
    %9 = sbr.rel (0) target = $region5
  $region4: #{_linear_forward.1} parent=0 // pred_region
    _
  $region5: #{_linear_forward.1} parent=0 // pred_fallthru
    _
  // Predicated region
  $region6: #{_linear_forward.1} parent=0 // pred_check
    _
  $region7: #{_linear_forward.1} parent=0 // pred_check_branch
    %11 = sbr.rel (0) target = $region9
  $region8: #{_linear_forward.1} parent=0 // pred_region
    _
  $region9: #{_linear_forward.1} parent=0 // pred_fallthru
    _
  // Predicated region
  $region10: #{_linear_forward.1} parent=0 // pred_check
    _
  $region11: #{_linear_forward.1} parent=0 // pred_check_branch
    %13 = sbr.rel (0) target = $region13
  $region12: #{_linear_forward.1} parent=0 // pred_region
    _
  $region13: #{_linear_forward.1} parent=0 // pred_fallthru
    _
  %p15 = scmp.eq.s32.totalorder 0, 0
  // Predicated region
  $region14: #{_linear_forward.1} parent=0 // pred_check
    %p16 = pneg %p15
  $region15: #{_linear_forward.1} parent=0 // pred_check_branch
    %18 = sbr.rel (%p16) target = $region17
  $region16: #{_linear_forward.1} parent=0 // pred_region
    %19 = vst [vmem:[#allocation2] sm:$0xff] 0.0
    %20 = vst [vmem:[#allocation2 + $0x8] sm:$0xff] 0.0
  $region17: #{_linear_forward.1} parent=0 // pred_fallthru
    _
  %v21 = vld [vmem:[#allocation2] sm:$0xff]
  %v22 = vld [vmem:[#allocation2 + $0x8] sm:$0xff]
  %v23 = vld [vmem:[%s0] sm:$0xf]
  %v24 = vld [vmem:[%s0 + $0x4] sm:$0xf]
  %v25 = vld [vmem:[%s1] sm:$0xf]
  %v26 = vld [vmem:[%s1 + $0x4] sm:$0xf]
  %v27 = vld [vmem:[%s1 + $0x8] sm:$0xf]
  %v28 = vld [vmem:[%s1 + $0xc] sm:$0xf]
  %v31 = vunpack.c.l.b16 %v23
  %v32 = vunpack.c.l.b16 %v24
  %v33 = vpack.c.b16 %v32, %v31
  %v38 = vunpack.c.l.b16 %v25
  %v39 = vunpack.c.l.b16 %v26
  %v40 = vunpack.c.l.b16 %v27
  %v41 = vunpack.c.l.b16 %v28
  %v42 = vpack.c.b16 %v39, %v38
  %v43 = vpack.c.b16 %v41, %v40
  %vm46 = vcmask 261120
  %v48 = vsel %vm46, %v33, 0
  %50 = vmatprep.subr.bf16.mxu0 0
  %51 = vmatpush1.bf16.msra.mxu0 0
  %52 = vmatprep.subr.bf16.mxu0 0
  %53 = vmatpush1.bf16.msra.mxu0 0
  %54 = vmatprep.subr.bf16.mxu0 0
  %55 = vmatpush1.bf16.msra.mxu0 0
  %56 = vmatprep.subr.bf16.mxu0 0
  %57 = vmatpush1.bf16.msra.mxu0 0
  %58 = vmatprep.subr.bf16.mxu0 0
  %59 = vmatpush1.bf16.msra.mxu0 0
  %60 = vmatprep.subr.bf16.mxu0 0
  %61 = vmatpush1.bf16.msra.mxu0 0
  %62 = vmatprep.subr.bf16.mxu0 0
  %63 = vmatpush1.bf16.msra.mxu0 %v43
  %64 = vmatprep.subr.bf16.mxu0 0
  %65 = vmatpush1.bf16.msra.mxu0 %v42
  %66 = vmatprep.subr.bf16.mxu0 0
  %67 = vmatpush2.bf16.msra.mxu0 0
  %68 = vmatprep.subr.bf16.mxu0 0
  %69 = vmatpush2.bf16.msra.mxu0 0
  %70 = vmatprep.subr.bf16.mxu0 0
  %71 = vmatpush2.bf16.msra.mxu0 0
  %72 = vmatprep.subr.bf16.mxu0 0
  %73 = vmatpush2.bf16.msra.mxu0 0
  %74 = vmatprep.subr.bf16.mxu0 0
  %75 = vmatpush2.bf16.msra.mxu0 0
  %76 = vmatprep.subr.bf16.mxu0 0
  %77 = vmatpush2.bf16.msra.mxu0 0
  %78 = vmatprep.subr.bf16.mxu0 0
  %79 = vmatpush2.bf16.msra.mxu0 0
  %80 = vmatprep.subr.bf16.mxu0 0
  %81 = vmatpush2.bf16.msra.mxu0 0
  %82 = vmatprep.mubr.bf16.mxu0 0
  %83 = vmatmul.mubr.bf16.gmra.mxu0 %v48
  %v84 = vpop.f32.mrf.mxu0
  %v85 = vadd.f32 0.0, %v84
  %v86 = vpop.f32.mrf.mxu0
  %v87 = vpop.f32.mrf.mxu0
  %v88 = vadd.f32 0.0, %v87
  %v89 = vpop.f32.mrf.mxu0
  %90 = vdwg.mxu0
  %v91 = vadd.f32 %v21, %v85
  %v92 = vadd.f32 %v22, %v88
  %93 = vst [vmem:[#allocation2] sm:$0xff] %v91
  %94 = vst [vmem:[#allocation2 + $0x8] sm:$0xff] %v92
  // Predicated region
  $region18: #{_linear_forward.1} parent=0 // pred_check
    %p95 = pneg %p15
  $region19: #{_linear_forward.1} parent=0 // pred_check_branch
    %97 = sbr.rel (%p95) target = $region21
  $region20: #{_linear_forward.1} parent=0 // pred_region
    %v98 = vld [vmem:[#allocation2] sm:$0xff]
    %v99 = vld [vmem:[#allocation2 + $0x8] sm:$0xff]
    %v100 = vld [vmem:[%s2] sm:$0x1]
    %v102 = vlaneseq
    %v103 = vshrl.u32 %v102, 7
    %v104 = vsub.s32 0, %v103
    %v105 = vrot.slane %v100, %v104
    %v107 = vadd.f32 %v98, %v105
    %v108 = vadd.f32 %v99, %v105
    %109 = vst [vmem:[%s3] sm:$0xff] %v107
    %110 = vst [vmem:[%s3 + $0x8] sm:$0xff] %v108
  $region21: #{_linear_forward.1} parent=0 // pred_fallthru
    _
  // Predicated region
  $region22: #{_linear_forward.1} parent=0 // pred_check
    _
  $region23: #{_linear_forward.1} parent=0 // pred_check_branch
    %112 = sbr.rel (0) target = $region25
  $region24: #{_linear_forward.1} parent=0 // pred_region
    _
  $region25: #{_linear_forward.1} parent=0 // pred_fallthru
    _
  // Predicated region
  $region26: #{_linear_forward.1} parent=0 // pred_check
    _
  $region27: #{_linear_forward.1} parent=0 // pred_check_branch
    %114 = sbr.rel (0) target = $region29
  $region28: #{_linear_forward.1} parent=0 // pred_region
    _
  $region29: #{_linear_forward.1} parent=0 // pred_fallthru
    _

</llo_original>
